<compile_context>
chip_gen: v5e
topology: v5e:2x2
jax: 0.10.0
libtpu: 0.0.40
codegen_flags: <defaults>
</compile_context>

<pallas_src>
import functools

import jax
import jax.numpy as jnp
from jax.experimental import pallas as pl
from jax.experimental.pallas import tpu as pltpu


def _layernorm_kernel(x_ref, g_ref, o_ref, *, eps):
    # x_ref: (bn, C, T)   g_ref: (1, C, 1)   o_ref: (bn, C, T)
    x = x_ref[...].astype(jnp.float32)
    mean = jnp.mean(x, axis=1, keepdims=True)          # (bn, 1, T)
    xc = x - mean                                      # reused for var and out
    var = jnp.mean(xc * xc, axis=1, keepdims=True)     # biased variance
    inv = jax.lax.rsqrt(var + eps)                     # (bn, 1, T)
    g = g_ref[...].astype(jnp.float32)                 # (1, C, 1)
    o_ref[...] = (xc * (inv * g)).astype(o_ref.dtype)


def _block_footprint_bytes(bn, C, tile_s, itemsize):
    """Rough VMEM footprint of one pipeline step for this block choice."""
    elems = bn * C * tile_s
    io = 2 * 2 * elems * itemsize   # double-buffered input + output blocks
    f32_tmp = 3 * elems * 4         # f32 temporaries inside the kernel body
    return io + f32_tmp


def _vmem_budget():
    """(per-block budget, vmem_limit_bytes) sized per TPU generation."""
    try:
        cap = int(pltpu.get_tpu_info().vmem_capacity_bytes)
    except Exception:
        cap = 64 * 1024 * 1024  # conservative: v7x per-core VMEM
    # Leave headroom for compiler temporaries; never request more than 96 MiB.
    vmem_limit = min(cap * 3 // 4, 96 * 1024 * 1024)
    return vmem_limit // 2, vmem_limit


def _choose_tiles(N, C, S, itemsize, block_budget):
    # Spatial tile: largest multiple-of-128 divisor of S (lane-dense stores),
    # or S itself (full-dim block is always legal), that fits the budget.
    cands = sorted({t for t in range(128, S + 1, 128) if S % t == 0} | {S},
                   reverse=True)
    tile_s = cands[-1]  # smallest candidate as fallback if nothing fits
    for t in cands:
        if _block_footprint_bytes(1, C, t, itemsize) <= block_budget:
            tile_s = t
            break
    steps_s = S // tile_s

    # Batch fold: largest divisor of N that still fits the budget and keeps at
    # least 2 grid steps (so both v7x TensorCores get work) when possible.
    bn = 1
    for cand in sorted((d for d in range(1, N + 1) if N % d == 0), reverse=True):
        if _block_footprint_bytes(cand, C, tile_s, itemsize) > block_budget:
            continue
        steps = (N // cand) * steps_s
        if steps >= 2 or N * steps_s < 2:
            bn = cand
            break
    return bn, tile_s


def layer_norm(x, gamma, eps=1e-5):
    """x: (N, C, D, H, W); gamma: (1, C, 1, 1, 1). Returns same shape/dtype."""
    N, C, D, H, W = x.shape
    S = D * H * W
    x2 = x.reshape(N, C, S)
    g2 = gamma.reshape(1, C, 1)

    block_budget, vmem_limit = _vmem_budget()
    bn, tile_s = _choose_tiles(N, C, S, x.dtype.itemsize, block_budget)
    # Note: if S has no multiple-of-128 divisor and S alone exceeds the budget,
    # we still fall back to tile_s = S (correct, but may need a masked tail for
    # better perf on such shapes).

    grid = (N // bn, S // tile_s)
    kernel = functools.partial(_layernorm_kernel, eps=eps)

    out = pl.pallas_call(
        kernel,
        out_shape=jax.ShapeDtypeStruct((N, C, S), x.dtype),
        grid_spec=pltpu.PrefetchScalarGridSpec(
            num_scalar_prefetch=0,
            grid=grid,
            in_specs=[
                pl.BlockSpec((bn, C, tile_s), lambda n, s: (n, 0, s)),
                # gamma: constant index -> stays resident in VMEM, no per-step DMA
                pl.BlockSpec((1, C, 1), lambda n, s: (0, 0, 0)),
            ],
            out_specs=pl.BlockSpec((bn, C, tile_s), lambda n, s: (n, 0, s)),
        ),
        compiler_params=pltpu.CompilerParams(
            dimension_semantics=("parallel", "parallel"),
            vmem_limit_bytes=int(vmem_limit),
        ),
    )(x2, g2)
    return out.reshape(N, C, D, H, W)


def _reference(x, gamma, eps=1e-5):
    xf = x.astype(jnp.float32)
    mean = jnp.mean(xf, axis=1, keepdims=True)
    var = jnp.mean((xf - mean) ** 2, axis=1, keepdims=True)
    return ((xf - mean) / jnp.sqrt(var + eps) * gamma.astype(jnp.float32)).astype(x.dtype)


if __name__ == "__main__":
    key = jax.random.PRNGKey(0)
    N, C, D, H, W = 2, 4, 4, 8, 8  # S = D*H*W = 256
    x = jax.random.normal(key, (N, C, D, H, W), dtype=jnp.float32)

    # Parameter from __init__: gamma of shape (1, dim, 1, 1, 1), deterministic init.
    gamma = (1.0 + 0.1 * jnp.arange(C, dtype=jnp.float32)).reshape(1, C, 1, 1, 1)

    y = layer_norm(x, gamma, eps=1e-5)
    y = jax.block_until_ready(y)

    y_ref = _reference(x, gamma, eps=1e-5)
    assert y.shape == x.shape and y.dtype == x.dtype
    assert jnp.allclose(y, y_ref, atol=1e-5, rtol=1e-5), "mismatch vs reference"

    print("KERNEL_OK")
</pallas_src>

<mosaic_0001>
module attributes {stable_mosaic.version = 11 : i64} {
  func.func @_layernorm_kernel(%arg0: i32, %arg1: i32, %arg2: memref<1x4x256xf32, #tpu.memory_space<vmem>>, %arg3: memref<1x4x1xf32, #tpu.memory_space<vmem>>, %arg4: memref<1x4x256xf32, #tpu.memory_space<vmem>>) attributes {dimension_semantics = [#tpu.dimension_semantics<parallel>, #tpu.dimension_semantics<parallel>], iteration_bounds = array<i64: 2, 1>, scalar_prefetch = 0 : i64, scratch_operands = 0 : i64, tpu.core_type = #tpu.core_type<tc>, window_params = [{transform_indices = @transform_0, window_bounds = array<i64: 1, 4, 256>}, {pipeline_mode = #tpu.pipeline_mode<synchronous>, transform_indices = @transform_1, window_bounds = array<i64: 1, 4, 1>}, {transform_indices = @transform_2, window_bounds = array<i64: 1, 4, 256>}]} {
    %c0 = arith.constant 0 : index
    %c0_0 = arith.constant 0 : index
    %c0_1 = arith.constant 0 : index
    %0 = vector.load %arg2[%c0, %c0_0, %c0_1] : memref<1x4x256xf32, #tpu.memory_space<vmem>>, vector<1x4x256xf32>
    %cst = arith.constant dense<0.000000e+00> : vector<1x256xf32>
    %1 = vector.multi_reduction <add>, %0, %cst [1] : vector<1x4x256xf32> to vector<1x256xf32>
    %2 = vector.shape_cast %1 : vector<1x256xf32> to vector<1x1x256xf32>
    %cst_2 = arith.constant 4.000000e+00 : f32
    %3 = vector.broadcast %cst_2 : f32 to vector<1x1x256xf32>
    %4 = arith.divf %2, %3 : vector<1x1x256xf32>
    %5 = vector.broadcast %4 : vector<1x1x256xf32> to vector<1x4x256xf32>
    %6 = arith.subf %0, %5 : vector<1x4x256xf32>
    %7 = arith.mulf %6, %6 : vector<1x4x256xf32>
    %cst_3 = arith.constant dense<0.000000e+00> : vector<1x256xf32>
    %8 = vector.multi_reduction <add>, %7, %cst_3 [1] : vector<1x4x256xf32> to vector<1x256xf32>
    %9 = vector.shape_cast %8 : vector<1x256xf32> to vector<1x1x256xf32>
    %cst_4 = arith.constant 4.000000e+00 : f32
    %10 = vector.broadcast %cst_4 : f32 to vector<1x1x256xf32>
    %11 = arith.divf %9, %10 : vector<1x1x256xf32>
    %cst_5 = arith.constant 9.99999974E-6 : f32
    %12 = vector.broadcast %cst_5 : f32 to vector<1x1x256xf32>
    %13 = arith.addf %11, %12 : vector<1x1x256xf32>
    %14 = math.rsqrt %13 : vector<1x1x256xf32>
    %c0_6 = arith.constant 0 : index
    %c0_7 = arith.constant 0 : index
    %c0_8 = arith.constant 0 : index
    %15 = vector.load %arg3[%c0_6, %c0_7, %c0_8] : memref<1x4x1xf32, #tpu.memory_space<vmem>>, vector<1x4x1xf32>
    %16 = vector.broadcast %14 : vector<1x1x256xf32> to vector<1x4x256xf32>
    %17 = vector.broadcast %15 : vector<1x4x1xf32> to vector<1x4x256xf32>
    %18 = arith.mulf %16, %17 : vector<1x4x256xf32>
    %19 = arith.mulf %6, %18 : vector<1x4x256xf32>
    %c0_9 = arith.constant 0 : index
    %c0_10 = arith.constant 0 : index
    %c0_11 = arith.constant 0 : index
    %20 = vector.load %arg4[%c0_9, %c0_10, %c0_11] : memref<1x4x256xf32, #tpu.memory_space<vmem>>, vector<1x4x256xf32>
    tpu.vector_store %arg4[%c0_9, %c0_10, %c0_11], %19 {strides = array<i32>} : memref<1x4x256xf32, #tpu.memory_space<vmem>>, vector<1x4x256xf32>,
    return
  }
  func.func @transform_0(%arg0: i32, %arg1: i32) -> (i32, i32, i32) {
    %c0_i32 = arith.constant 0 : i32
    %c0_i32_0 = arith.constant 0 : i32
    return %arg0, %c0_i32, %arg1 : i32, i32, i32
  }
  func.func @transform_1(%arg0: i32, %arg1: i32) -> (i32, i32, i32) {
    %c0_i32 = arith.constant 0 : i32
    %c0_i32_0 = arith.constant 0 : i32
    %c0_i32_1 = arith.constant 0 : i32
    %c0_i32_2 = arith.constant 0 : i32
    return %c0_i32, %c0_i32_0, %c0_i32_1 : i32, i32, i32
  }
  func.func @transform_2(%arg0: i32, %arg1: i32) -> (i32, i32, i32) {
    %c0_i32 = arith.constant 0 : i32
    %c0_i32_0 = arith.constant 0 : i32
    return %arg0, %c0_i32, %arg1 : i32, i32, i32
  }
}

</mosaic_0001>

<llo_original>
// kernel: tpu_custom_call.1
$region0: #{tpu_custom_call.1}
  #allocation0 [shape = 'u32[]', space=smem, size = 0x4, offset = 0x4, fixed_abs, tag = 'smem constant byte address 0x4 - core index']
  #allocation1 [shape = 'u32[72,128]{1,0:T(1,128)}', space=vmem, size = 0x9000, scoped, tag = 'internal scratch']
  %s0 = inlined_call_operand.hbm [shape: f32[2,4,256], index: 0, kind: input, shape index: {}]
  %s1 = inlined_call_operand.vmem [shape: f32[1,4,1], index: 1, kind: input, shape index: {}]
  %s2 = inlined_call_operand.hbm [shape: f32[2,4,256], index: 2, kind: output, shape index: {}]
  %s3 = sld [smem:[#allocation0]]
  $region45: #{tpu_custom_call.1} parent=0
    _
  %s5 = ssub.s32 1, %s3
  %s6 = scalar_select 0, %s5, %s3
  $region1: #{tpu_custom_call.1} parent=0
    #allocation2 [shape = 'u8[8192]{0}', space=vmem, size = 0x2000, scoped, tag = 'input window, operand 0']
    #allocation3 [shape = 's32[2]{0}', space=sflag, size = 0x8, scoped, tag = 'scoped memory for tpu_custom_call.1']
    #allocation4 [shape = 's32[2]{0}', space=sflag, size = 0x8, scoped, tag = 'scoped memory for tpu_custom_call.1']
    #allocation5 [shape = 'u8[8192]{0}', space=vmem, size = 0x2000, scoped, tag = 'output window, operand 0']
    %7 = vsyncpa [#allocation3], 0
    %s8 = scalar_lea.sflag [#allocation3], 1
    %9 = vsyncpa %s8, 0
    %10 = vsyncpa [#allocation4], 0
    %s11 = scalar_lea.sflag [#allocation4], 1
    %12 = vsyncpa %s11, 0
    loop: start=0, step=1, limit=4
    $region2: #{tpu_custom_call.1} parent=1 // loop_pre_header
      _
    $region3: #{tpu_custom_call.1} parent=1 // loop_header
      %s14 = sphi 0, %s18
      %p15 = scmp.ge.s32.totalorder %s14, 4
      %s21 = sphi 0, %s33
      %s22 = sphi 0, %s29
      %s23 = sphi 0, %s21
      %s24 = sphi 0, %s22
      %s25 = sphi 0, %s23
      %s26 = sphi 0, %s24
      %s38 = sphi 0, %s40
      %s41 = sphi 0, %s38
      %s42 = sphi 0, %s41
      %s58 = sphi 0, %s42
      %s62 = sphi 0, %s62
      %s64 = sphi 0, %s62
      %s65 = sphi 0, %s64
      %s79 = sphi 0, %s65
      %s87 = sphi 0, %s89
      %s90 = sphi 0, %s87
      %s91 = sphi 0, %s90
      %s107 = sphi 0, %s91
    $region4: #{tpu_custom_call.1} parent=1 // loop_header_branch
      %17 = sbr.rel (%p15) target = $region8
    $region5: #{tpu_custom_call.1} parent=1 // loop_body
      %s19 = ssub.s32 %s14, 1
      %s20 = ssub.s32 %s14, 2
      %s27 = sadd.s32 1, %s22
      %p28 = scmp.ge.s32.totalorder %s27, 1
      %s29 = scalar_select %p28, 0, %s27
      %s30 = sadd.s32 1, %s21
      %s31 = scalar_select %p28, %s30, %s21
      %p32 = scmp.ge.s32.totalorder %s31, 2
      %s33 = scalar_select %p32, 0, %s31
      %s34 = ssub.s32 %s21, %s33
      %s35 = ssub.s32 %s22, %s29
      %s36 = sor.u32 %s34, %s35
      %p37 = scmp.eq.s32.totalorder %s36, 0
      %s39 = sadd.s32 %s38, 1
      %s40 = scalar_select %p37, %s38, %s39
      %p43 = pneg %p37
      %p44 = scmp.eq.s32.totalorder %s14, 1
      %p45 = por %p43, %p44
      %p46 = scmp.ne.s32.totalorder %s38, %s41
      %p47 = scmp.eq.s32.totalorder %s14, 0
      %p48 = por %p46, %p47
      %p49 = scmp.ne.s32.totalorder %s38, %s41
      %p50 = scmp.eq.s32.totalorder %s19, 1
      %p51 = por %p49, %p50
      %p52 = scmp.ne.s32.totalorder %s41, %s42
      %p53 = scmp.eq.s32.totalorder %s19, 0
      %p54 = por %p52, %p53
      %p55 = scmp.ne.s32.totalorder %s41, %s42
      %p56 = scmp.eq.s32.totalorder %s20, 1
      %p57 = por %p55, %p56
      %p59 = scmp.ne.s32.totalorder %s42, %s58
      %p60 = scmp.eq.s32.totalorder %s20, 0
      %p61 = por %p59, %p60
      %s63 = sadd.s32 %s62, 1
      %p66 = scmp.eq.s32.totalorder %s14, 1
      %p67 = scmp.ne.s32.totalorder %s62, %s64
      %p68 = scmp.eq.s32.totalorder %s14, 0
      %p69 = por %p67, %p68
      %p70 = scmp.ne.s32.totalorder %s62, %s64
      %p71 = scmp.eq.s32.totalorder %s19, 1
      %p72 = por %p70, %p71
      %p73 = scmp.ne.s32.totalorder %s64, %s65
      %p74 = scmp.eq.s32.totalorder %s19, 0
      %p75 = por %p73, %p74
      %p76 = scmp.ne.s32.totalorder %s64, %s65
      %p77 = scmp.eq.s32.totalorder %s20, 1
      %p78 = por %p76, %p77
      %p80 = scmp.ne.s32.totalorder %s65, %s79
      %p81 = scmp.eq.s32.totalorder %s20, 0
      %p82 = por %p80, %p81
      %s83 = ssub.s32 %s21, %s33
      %s84 = ssub.s32 %s22, %s29
      %s85 = sor.u32 %s83, %s84
      %p86 = scmp.eq.s32.totalorder %s85, 0
      %s88 = sadd.s32 %s87, 1
      %s89 = scalar_select %p86, %s87, %s88
      %p92 = pneg %p86
      %p93 = scmp.eq.s32.totalorder %s14, 1
      %p94 = por %p92, %p93
      %p95 = scmp.ne.s32.totalorder %s87, %s90
      %p96 = scmp.eq.s32.totalorder %s14, 0
      %p97 = por %p95, %p96
      %p98 = scmp.ne.s32.totalorder %s87, %s90
      %p99 = scmp.eq.s32.totalorder %s19, 1
      %p100 = por %p98, %p99
      %p101 = scmp.ne.s32.totalorder %s90, %s91
      %p102 = scmp.eq.s32.totalorder %s19, 0
      %p103 = por %p101, %p102
      %p104 = scmp.ne.s32.totalorder %s90, %s91
      %p105 = scmp.eq.s32.totalorder %s20, 1
      %p106 = por %p104, %p105
      %p108 = scmp.ne.s32.totalorder %s91, %s107
      %p109 = scmp.eq.s32.totalorder %s20, 0
      %p110 = por %p108, %p109
      %p111 = scmp.le.s32.totalorder 1, %s14
      %p112 = scmp.lt.s32.totalorder %s14, 3
      %p113 = pnand %p111, %p112
      %p114 = pneg %p113
      // Predicated region
      $region9: #{tpu_custom_call.1} parent=5 // pred_check
        _
      $region10: #{tpu_custom_call.1} parent=5 // pred_check_branch
        %116 = sbr.rel (%p113) target = $region12
      $region11: #{tpu_custom_call.1} parent=5 // pred_region
        %s117 = ssub.s32 %s14, 1
        // Predicated region
        $region13: #{tpu_custom_call.1} parent=11 // pred_check
          %p118 = pneg %p75
        $region14: #{tpu_custom_call.1} parent=11 // pred_check_branch
          %120 = sbr.rel (%p118) target = $region16
        $region15: #{tpu_custom_call.1} parent=11 // pred_region
          _
        $region16: #{tpu_custom_call.1} parent=11 // pred_fallthru
          _
      $region12: #{tpu_custom_call.1} parent=5 // pred_fallthru
        _
      %p121 = scmp.lt.s32.totalorder %s14, 2
      // Predicated region
      $region17: #{tpu_custom_call.1} parent=5 // pred_check
        %p122 = pneg %p121
      $region18: #{tpu_custom_call.1} parent=5 // pred_check_branch
        %124 = sbr.rel (%p122) target = $region20
      $region19: #{tpu_custom_call.1} parent=5 // pred_region
        // Predicated region
        $region21: #{tpu_custom_call.1} parent=19 // pred_check
          %p125 = pneg %p48
        $region22: #{tpu_custom_call.1} parent=19 // pred_check_branch
          %127 = sbr.rel (%p125) target = $region24
        $region23: #{tpu_custom_call.1} parent=19 // pred_region
          %s128 = sand.u32 %s38, 1
          %s129 = scalar_lea.sflag [#allocation3], %s128
          %s130 = sand.u32 %s38, 1
          %s131 = smul.addr %s130, 8
          %s132 = scalar_lea.vmem [#allocation2], %s131
          %s133 = smul.u32 2, %s22
          %135 = vsyncadd %s129, 0
          %s136 = smul.addr %s21, 2
          %s137 = sadd.s32 %s133, %s136
          %s138 = smul.addr %s137, 4
          %s139 = scalar_lea.hbm %s0, %s138
          %s141 = sshll.u32 %s139, 4
          %s142 = int_to_ptr.hbm [resolvable:$true] %s141
          %s143 = sshll.u32 %s132, 4
          %s144 = int_to_ptr.vmem [resolvable:$true] %s143
          %146 = dma.hbm_to_vmem [thread:$0]  %s142, 128, %s144, %s129
        $region24: #{tpu_custom_call.1} parent=19 // pred_fallthru
          _
      $region20: #{tpu_custom_call.1} parent=5 // pred_fallthru
        _
      %p147 = scmp.le.s32.totalorder 1, %s14
      %p148 = scmp.lt.s32.totalorder %s14, 3
      %p149 = pnand %p147, %p148
      %p150 = pneg %p149
      // Predicated region
      $region25: #{tpu_custom_call.1} parent=5 // pred_check
        _
      $region26: #{tpu_custom_call.1} parent=5 // pred_check_branch
        %152 = sbr.rel (%p149) target = $region28
      $region27: #{tpu_custom_call.1} parent=5 // pred_region
        %s153 = ssub.s32 %s14, 1
        %s154 = sand.u32 %s41, 1
        %s155 = scalar_lea.sflag [#allocation3], %s154
        %s156 = sand.u32 %s41, 1
        %s157 = smul.addr %s156, 8
        %s158 = scalar_lea.vmem [#allocation2], %s157
        // Predicated region
        $region29: #{tpu_custom_call.1} parent=27 // pred_check
          %p159 = pneg %p54
        $region30: #{tpu_custom_call.1} parent=27 // pred_check_branch
          %161 = sbr.rel (%p159) target = $region32
        $region31: #{tpu_custom_call.1} parent=27 // pred_region
          %163 = dma.done %s155, 128
        $region32: #{tpu_custom_call.1} parent=27 // pred_fallthru
          _
        %s164 = sand.u32 %s41, 1
        %s165 = scalar_lea.sflag [#allocation3], %s164
        %s166 = sand.u32 %s41, 1
        %s167 = smul.addr %s166, 8
        %s168 = scalar_lea.vmem [#allocation2], %s167
        %p169 = pneg %p54
        %p170 = pneg %p51
        %p171 = pneg %p75
        %p172 = pneg %p72
        %p173 = pneg %p103
        %p174 = pneg %p100
        %s175 = sand.u32 %s90, 1
        %s176 = scalar_lea.sflag [#allocation4], %s175
        %s177 = sand.u32 %s90, 1
        %s178 = smul.addr %s177, 8
        %s179 = scalar_lea.vmem [#allocation5], %s178
        %s180 = smul.u32 2, %s24
        %s181 = smul.u32 2, %s24
        %v182 = vld [vmem:[%s158] sm:$0xff]
        %184 = vst [vmem:[#allocation1] ss:$2 sm:$0xff] %v182
        %v185 = vld.sshfl [vmem:[#allocation1] sm:$0xff pattern:$0x75316420]
        %v186 = vld.sshfl [vmem:[#allocation1 + $0x8] sm:$0xff pattern:$0x75316420]
        %vm189 = vcmask 1043456
        %v190 = vsel %vm189, %v185, 0.0
        %v191 = vrot.slane %v190, 4
        %v192 = vadd.f32 %v190, %v191
        %v193 = vrot.slane %v192, 2
        %v194 = vadd.f32 %v192, %v193
        %v195 = vrot.slane %v194, 1
        %v196 = vadd.f32 %v194, %v195
        %v197 = vsel %vm189, %v186, 0.0
        %v198 = vrot.slane %v197, 4
        %v199 = vadd.f32 %v197, %v198
        %v200 = vrot.slane %v199, 2
        %v201 = vadd.f32 %v199, %v200
        %v202 = vrot.slane %v201, 1
        %v203 = vadd.f32 %v201, %v202
        %v204 = vrcp.pop 4.0
        %v205 = vmul.f32 4.0, %v204
        %v206 = vsub.f32 1.0, %v205
        %v207 = vmul.f32 %v204, %v206
        %v208 = vadd.f32 %v204, %v207
        %vm209 = vweird.f32 %v204
        %v210 = vsel %vm209, %v204, %v208
        %v211 = vmul.f32 %v196, %v210
        %v212 = vmul.f32 %v203, %v210
        %v215 = vrot.slane %v212, 4
        %v216 = vsel %vm189, %v211, %v215
        %v218 = vsub.f32 %v182, %v216
        %v219 = vmul.f32 %v218, %v218
        %221 = vst [vmem:[#allocation1] ss:$2 sm:$0xff] %v219
        %v222 = vld.sshfl [vmem:[#allocation1] sm:$0xff pattern:$0x75316420]
        %v223 = vld.sshfl [vmem:[#allocation1 + $0x8] sm:$0xff pattern:$0x75316420]
        %v226 = vsel %vm189, %v222, 0.0
        %v227 = vrot.slane %v226, 4
        %v228 = vadd.f32 %v226, %v227
        %v229 = vrot.slane %v228, 2
        %v230 = vadd.f32 %v228, %v229
        %v231 = vrot.slane %v230, 1
        %v232 = vadd.f32 %v230, %v231
        %v233 = vsel %vm189, %v223, 0.0
        %v234 = vrot.slane %v233, 4
        %v235 = vadd.f32 %v233, %v234
        %v236 = vrot.slane %v235, 2
        %v237 = vadd.f32 %v235, %v236
        %v238 = vrot.slane %v237, 1
        %v239 = vadd.f32 %v237, %v238
        %v240 = vmul.f32 %v232, %v210
        %v241 = vmul.f32 %v239, %v210
        %v242 = vadd.f32 %v240, 1e-05
        %v243 = vadd.f32 %v241, 1e-05
        %v244 = vrsqrt.pop %v242
        %v245 = vmul.f32 %v244, %v242
        %v246 = vmul.f32 %v245, %v244
        %v247 = vmul.f32 0.5, %v246
        %v248 = vsub.f32 1.5, %v247
        %v249 = vmul.f32 %v244, %v248
        %vm250 = vweird.f32 %v242
        %vm251 = vweird.f32 %v244
        %vm252 = vmor %vm250, %vm251
        %v253 = vsel %vm252, %v244, %v249
        %v254 = vrsqrt.pop %v243
        %v255 = vmul.f32 %v254, %v243
        %v256 = vmul.f32 %v255, %v254
        %v257 = vmul.f32 0.5, %v256
        %v258 = vsub.f32 1.5, %v257
        %v259 = vmul.f32 %v254, %v258
        %vm260 = vweird.f32 %v243
        %vm261 = vweird.f32 %v254
        %vm262 = vmor %vm260, %vm261
        %v263 = vsel %vm262, %v254, %v259
        %v264 = vld [vmem:[%s1] sm:$0xf]
        %266 = vset.pattern.permute.xlu0 0
        %267 = vperm.xlu0 %266, %v264
        %v268 = vpop.permute.xlu0 %267
        %v270 = vmul.f32 %v253, %v268
        %v271 = vmul.f32 %v263, %v268
        %v274 = vrot.slane %v271, 4
        %v275 = vsel %vm189, %v270, %v274
        %v277 = vmul.f32 %v218, %v275
        %278 = vst [vmem:[%s179] sm:$0xff] %v277
        %s279 = sand.u32 %s90, 1
        %s280 = scalar_lea.sflag [#allocation4], %s279
        %s281 = sand.u32 %s90, 1
        %s282 = smul.addr %s281, 8
        %s283 = scalar_lea.vmem [#allocation5], %s282
        // Predicated region
        $region33: #{tpu_custom_call.1} parent=27 // pred_check
          %p284 = pneg %p100
        $region34: #{tpu_custom_call.1} parent=27 // pred_check_branch
          %286 = sbr.rel (%p284) target = $region36
        $region35: #{tpu_custom_call.1} parent=27 // pred_region
          %s287 = smul.u32 2, %s24
          %289 = vsyncadd %s280, 0
          %s290 = smul.addr %s23, 2
          %s291 = sadd.s32 %s287, %s290
          %s292 = smul.addr %s291, 4
          %s293 = scalar_lea.hbm %s2, %s292
          %s295 = sshll.u32 %s283, 4
          %s296 = int_to_ptr.vmem [resolvable:$true] %s295
          %s297 = sshll.u32 %s293, 4
          %s298 = int_to_ptr.hbm [resolvable:$true] %s297
          %300 = dma.vmem_to_hbm [thread:$0]  %s296, 128, %s298, %s280
        $region36: #{tpu_custom_call.1} parent=27 // pred_fallthru
          _
      $region28: #{tpu_custom_call.1} parent=5 // pred_fallthru
        _
      %p301 = scmp.le.s32.totalorder 2, %s14
      // Predicated region
      $region37: #{tpu_custom_call.1} parent=5 // pred_check
        %p302 = pneg %p301
      $region38: #{tpu_custom_call.1} parent=5 // pred_check_branch
        %304 = sbr.rel (%p302) target = $region40
      $region39: #{tpu_custom_call.1} parent=5 // pred_region
        %s305 = ssub.s32 %s14, 2
        // Predicated region
        $region41: #{tpu_custom_call.1} parent=39 // pred_check
          %p306 = pneg %p106
        $region42: #{tpu_custom_call.1} parent=39 // pred_check_branch
          %308 = sbr.rel (%p306) target = $region44
        $region43: #{tpu_custom_call.1} parent=39 // pred_region
          %s309 = sand.u32 %s91, 1
          %s310 = scalar_lea.sflag [#allocation4], %s309
          %s311 = sand.u32 %s91, 1
          %s312 = smul.addr %s311, 8
          %s313 = scalar_lea.vmem [#allocation5], %s312
          %315 = dma.done %s310, 128
        $region44: #{tpu_custom_call.1} parent=39 // pred_fallthru
          _
      $region40: #{tpu_custom_call.1} parent=5 // pred_fallthru
        _
    $region6: #{tpu_custom_call.1} parent=1 // loop_footer
      %s18 = sadd.s32 1, %s14
    $region7: #{tpu_custom_call.1} parent=1 // loop_footer_branch
      %13 = sbr.rel target = $region3
    $region8: #{tpu_custom_call.1} parent=1 // loop_exit
      _
    %316 = vsyncpa [#allocation3], 1
    %s317 = scalar_lea.sflag [#allocation3], 1
    %318 = vsyncpa %s317, 1
    %319 = vsyncpa [#allocation4], 1
    %s320 = scalar_lea.sflag [#allocation4], 1
    %321 = vsyncpa %s320, 1

</llo_original>
